<compile_context>
chip_gen: v7x
topology: tpu7x:2x2x1
jax: 0.10.0
libtpu: 0.0.40
codegen_flags: <defaults>
</compile_context>

<pallas_src>
import functools

import jax
import jax.numpy as jnp
from jax.experimental import pallas as pl
from jax.experimental.pallas import tpu as pltpu

BATCH_NORM_EPSILON = 1e-05


def _round_up(x, m):
    return (x + m - 1) // m * m


def _device_kind():
    try:
        return jax.devices()[0].device_kind.lower()
    except Exception:
        return ""


def _vmem_capacity_bytes(kind):
    try:
        return int(pltpu.get_tpu_info().vmem_capacity_bytes)
    except Exception:
        if "v7" in kind:
            return 64 * 1024 * 1024
        if any(t in kind for t in ("v4", "v5", "v6")):
            return 128 * 1024 * 1024
        return 64 * 1024 * 1024          # unknown: conservative, fits every gen


def _fused_head_kernel(x_hbm, *rest, num_hidden, eps):
    # rest = (w_hbm, gamma, beta) * num_hidden, (w_last, gamma, beta),
    #        o_ref, h_a, h_b, w_buf, w_sem
    hidden_refs = rest[: 3 * num_hidden]
    w_last, g_last, b_last = rest[3 * num_hidden: 3 * num_hidden + 3]
    o_ref = rest[3 * num_hidden + 3]
    h_a, h_b, w_buf, w_sem = rest[3 * num_hidden + 4:]

    n = h_a.shape[0]
    c_h = h_a.shape[1]
    tn_h = w_buf.shape[2]
    n_slabs = c_h // tn_h
    inv_n = 1.0 / float(n)

    def bn(y, g, b):
        # Training-mode BatchNorm1d, centered two-pass statistics in f32.
        mean = jnp.sum(y, axis=0, keepdims=True) * inv_n
        yc = y - mean
        var = jnp.sum(yc * yc, axis=0, keepdims=True) * inv_n
        scale = g * jax.lax.rsqrt(var + eps)          # rsqrt -> EUP (free slot)
        return yc * scale + b

    # ---- Hidden layers: computed once (grid step 0) into VMEM ping-pong scratch,
    #      reused by every last-layer C_out tile.
    @pl.when(pl.program_id(0) == 0)
    def _compute_hidden():
        pltpu.sync_copy(x_hbm, h_a)                   # stage the input once
        src, dst = h_a, h_b
        for li in range(num_hidden):
            w_hbm = hidden_refs[3 * li]
            g_ref = hidden_refs[3 * li + 1]
            b_ref = hidden_refs[3 * li + 2]

            if n_slabs == 1:
                # Whole weight fits one slab: single-buffered copy, static slices.
                pltpu.sync_copy(w_hbm, w_buf.at[0])
                y = jnp.dot(src[...], w_buf[0],
                            preferred_element_type=jnp.float32)
                g = g_ref[...].astype(jnp.float32)
                b = b_ref[...].astype(jnp.float32)
                dst[...] = jnp.maximum(bn(y, g, b), 0.0).astype(dst.dtype)
            else:
                # Stream the (c_h, c_h) weight from HBM in (c_h, tn_h) column
                # slabs, double-buffered.  BN stats are per-feature, so this
                # feature tiling is exact.  tn_h is a multiple of 128 here.
                def issue(slab, slot):
                    start = slab * tn_h
                    if not isinstance(start, int):
                        start = pl.multiple_of(start, tn_h)
                    pltpu.make_async_copy(
                        w_hbm.at[:, pl.ds(start, tn_h)],
                        w_buf.at[slot],
                        w_sem.at[slot],
                    ).start()

                issue(0, 0)

                @pl.loop(0, n_slabs)
                def _per_slab(s):
                    slot = s % 2
                    pltpu.make_async_copy(
                        w_hbm.at[:, pl.ds(0, tn_h)],    # shape-only descriptor
                        w_buf.at[slot],
                        w_sem.at[slot],
                    ).wait()

                    @pl.when(s + 1 < n_slabs)
                    def _prefetch():
                        issue(jnp.minimum(s + 1, n_slabs - 1), 1 - slot)

                    y = jnp.dot(src[...], w_buf[slot],
                                preferred_element_type=jnp.float32)
                    col = pl.multiple_of(s * tn_h, tn_h)
                    g = g_ref[:, pl.ds(col, tn_h)].astype(jnp.float32)
                    b = b_ref[:, pl.ds(col, tn_h)].astype(jnp.float32)
                    out = jnp.maximum(bn(y, g, b), 0.0)
                    dst[:, pl.ds(col, tn_h)] = out.astype(dst.dtype)

            src, dst = dst, src

    final_h = h_a if num_hidden % 2 == 0 else h_b

    # ---- Last layer (no ReLU), tiled over C_out by the grid (lane-dense tiles).
    y = jnp.dot(final_h[...], w_last[...], preferred_element_type=jnp.float32)
    g = g_last[...].astype(jnp.float32)
    b = b_last[...].astype(jnp.float32)
    o_ref[...] = bn(y, g, b).astype(o_ref.dtype)


def contrastive_head_forward(x, params, *, tn=None, hidden_slab=None):
    """params: list of (w [Cin, Cout], gamma [1, Cout], beta [1, Cout]) per layer.

    Linear weights are stored pre-transposed as [C_in, C_out] so the kernel does
    y = x @ W.  MXU operands use the dtype of the supplied weights (pass bf16 for
    2-4x MXU throughput); accumulation and BN math stay f32.
    """
    n, c_in = x.shape
    num_layers = len(params)
    num_hidden = num_layers - 1
    c_out = params[-1][0].shape[1]
    out_dtype = x.dtype

    compute_dtype = params[0][0].dtype
    x = x.astype(compute_dtype)
    params = [(w.astype(compute_dtype), g, b) for (w, g, b) in params]

    kind = _device_kind()
    wide_mxu = ("v6" in kind) or ("v7" in kind)     # 2x256x256 MXU generations

    # ---- Last-layer feature tiling: lane-dense (multiple of 128); 256 on
    #      256-wide-MXU chips.  Pad C_out up if it is not 128-aligned (padded
    #      features have zero weights -> BN emits beta=0 there; sliced off below).
    c_out_pad = _round_up(c_out, 128)
    if tn is None:
        tn = 256 if (wide_mxu and c_out_pad % 256 == 0) else 128
    tn = max(128, min(int(tn), c_out_pad))
    if c_out_pad % tn != 0 or tn % 128 != 0:
        tn = 128
    grid = (c_out_pad // tn,)

    w_l, g_l, b_l = params[-1]
    if c_out_pad != c_out:
        pad = c_out_pad - c_out
        w_l = jnp.pad(w_l, ((0, 0), (0, pad)))
        g_l = jnp.pad(g_l, ((0, 0), (0, pad)), constant_values=1)
        b_l = jnp.pad(b_l, ((0, 0), (0, pad)))

    # ---- Hidden weight slab width (weights streamed from HBM, never fully
    #      VMEM-resident).  Multi-slab streaming only when 128-aligned.
    if (hidden_slab is not None and c_in % hidden_slab == 0
            and (hidden_slab % 128 == 0 or hidden_slab == c_in)):
        tn_h = int(hidden_slab)
    elif c_in % 256 == 0:
        tn_h = 256
    elif c_in % 128 == 0:
        tn_h = 128
    else:
        tn_h = c_in
    n_slabs = c_in // tn_h
    n_wbufs = 2 if n_slabs > 1 else 1

    # ---- Flat inputs + BlockSpecs.
    flat_inputs = [x]
    in_specs = [pl.BlockSpec(memory_space=pl.ANY)]          # x: DMA'd once in-kernel
    for (w, gamma, beta) in params[:-1]:
        d = w.shape[1]
        flat_inputs += [w, gamma, beta]
        in_specs += [
            pl.BlockSpec(memory_space=pl.ANY),               # streamed in slabs
            pl.BlockSpec((1, d), lambda j: (0, 0)),          # tiny constant rows
            pl.BlockSpec((1, d), lambda j: (0, 0)),
        ]
    flat_inputs += [w_l, g_l, b_l]
    in_specs += [
        pl.BlockSpec((c_in, tn), lambda j: (0, j)),
        pl.BlockSpec((1, tn), lambda j: (0, j)),
        pl.BlockSpec((1, tn), lambda j: (0, j)),
    ]

    scratch_shapes = [
        pltpu.VMEM((n, c_in), compute_dtype),                # activation ping
        pltpu.VMEM((n, c_in), compute_dtype),                # activation pong
        pltpu.VMEM((n_wbufs, c_in, tn_h), compute_dtype),    # weight slab buffer(s)
        pltpu.SemaphoreType.DMA((2,)),
    ]

    # ---- Generation-aware VMEM budget from the actual resident buffers.
    isz = jnp.dtype(compute_dtype).itemsize
    osz = jnp.dtype(out_dtype).itemsize
    resident = (
        2 * n * c_in * isz                          # ping-pong activations
        + n_wbufs * c_in * tn_h * isz               # weight slab buffer(s)
        + 2 * (c_in * tn * isz + 2 * tn * 4)        # last-layer blocks (x2 pipeline)
        + 2 * n * tn * osz                          # output blocks (x2 pipeline)
        + num_hidden * 4 * c_in * 4                 # hidden gamma/beta blocks
        + 6 * n * max(tn_h, tn) * 4                 # f32 matmul/BN temporaries
    )
    cap = _vmem_capacity_bytes(kind)
    vmem_limit = int(min(cap - 8 * 2**20, max(resident + 8 * 2**20, 32 * 2**20)))
    vmem_limit = max(vmem_limit, 16 * 2**20)

    kernel = functools.partial(_fused_head_kernel, num_hidden=num_hidden,
                               eps=BATCH_NORM_EPSILON)

    out = pl.pallas_call(
        kernel,
        out_shape=jax.ShapeDtypeStruct((n, c_out_pad), out_dtype),
        grid=grid,
        in_specs=in_specs,
        out_specs=pl.BlockSpec((n, tn), lambda j: (0, j)),
        scratch_shapes=scratch_shapes,
        compiler_params=pltpu.CompilerParams(
            # Hidden activations persist in scratch across the C_out grid and are
            # initialized at step 0 -> this axis must stay "arbitrary".
            dimension_semantics=("arbitrary",),
            vmem_limit_bytes=vmem_limit,
        ),
    )(*flat_inputs)

    return out[:, :c_out] if c_out_pad != c_out else out


def make_contrastive_head_params(key, channels_in, out_dim=128, num_layers=3,
                                 dtype=jnp.float32):
    """Deterministic synthetic params matching the torch module's shapes."""
    params = []
    for i in range(num_layers):
        last = (i == num_layers - 1)
        dim = out_dim if last else channels_in
        key, wk = jax.random.split(key)
        w = (jax.random.normal(wk, (channels_in, dim), dtype=jnp.float32)
             * (1.0 / jnp.sqrt(channels_in))).astype(dtype)
        gamma = jnp.ones((1, dim), dtype=jnp.float32)    # BN weight init = 1
        beta = jnp.zeros((1, dim), dtype=jnp.float32)    # BN bias init = 0
        params.append((w, gamma, beta))
    return params


def _ref_forward(x, params):
    """Pure-JAX reference of the same semantics."""
    h = x
    num_layers = len(params)
    for i, (w, gamma, beta) in enumerate(params):
        y = jnp.dot(h, w, preferred_element_type=jnp.float32,
                    precision=jax.lax.Precision.HIGHEST)
        mean = jnp.mean(y, axis=0, keepdims=True)
        var = jnp.mean((y - mean) ** 2, axis=0, keepdims=True)
        y = (y - mean) / jnp.sqrt(var + BATCH_NORM_EPSILON) * gamma + beta
        if i != num_layers - 1:
            y = jnp.maximum(y, 0.0)
        h = y
    return h


if __name__ == "__main__":
    key = jax.random.PRNGKey(0)
    batch, channels_in, out_dim, num_layers = 8, 32, 128, 3

    kx, kp = jax.random.split(key)
    x = jax.random.normal(kx, (batch, channels_in), dtype=jnp.float32)
    params = make_contrastive_head_params(kp, channels_in, out_dim, num_layers)

    # f32 path: numerically faithful to the torch module (training-mode forward).
    out = jax.block_until_ready(contrastive_head_forward(x, params))
    ref = _ref_forward(x, params)
    assert out.shape == (batch, out_dim), out.shape
    max_err = float(jnp.max(jnp.abs(out - ref)))
    assert jnp.allclose(out, ref, atol=1e-3, rtol=1e-3), max_err

    # bf16 MXU-operand path (production precision choice): smoke test only.
    x16 = x.astype(jnp.bfloat16)
    p16 = [(w.astype(jnp.bfloat16), g, b) for (w, g, b) in params]
    out16 = jax.block_until_ready(contrastive_head_forward(x16, p16))
    assert out16.shape == (batch, out_dim), out16.shape
    assert bool(jnp.all(jnp.isfinite(out16.astype(jnp.float32))))

    print("KERNEL_OK")
</pallas_src>

<mosaic_0001>
module attributes {stable_mosaic.version = 11 : i64} {
  func.func @_fused_head_kernel(%arg0: i32, %arg1: memref<8x32xf32, #tpu.memory_space<any>>, %arg2: memref<32x32xf32, #tpu.memory_space<any>>, %arg3: memref<1x32xf32, #tpu.memory_space<vmem>>, %arg4: memref<1x32xf32, #tpu.memory_space<vmem>>, %arg5: memref<32x32xf32, #tpu.memory_space<any>>, %arg6: memref<1x32xf32, #tpu.memory_space<vmem>>, %arg7: memref<1x32xf32, #tpu.memory_space<vmem>>, %arg8: memref<32x128xf32, #tpu.memory_space<vmem>>, %arg9: memref<1x128xf32, #tpu.memory_space<vmem>>, %arg10: memref<1x128xf32, #tpu.memory_space<vmem>>, %arg11: memref<8x128xf32, #tpu.memory_space<vmem>>, %arg12: memref<8x32xf32, #tpu.memory_space<vmem>>, %arg13: memref<8x32xf32, #tpu.memory_space<vmem>>, %arg14: memref<1x32x32xf32, #tpu.memory_space<vmem>>, %arg15: memref<2x!tpu.dma_semaphore, #tpu.memory_space<semaphore_mem>>) attributes {dimension_semantics = [#tpu.dimension_semantics<arbitrary>], iteration_bounds = array<i64: 1>, scalar_prefetch = 0 : i64, scratch_operands = 4 : i64, tpu.core_type = #tpu.core_type<tc>, window_params = [{}, {}, {pipeline_mode = #tpu.pipeline_mode<synchronous>, transform_indices = @transform_2, window_bounds = array<i64: 1, 32>}, {pipeline_mode = #tpu.pipeline_mode<synchronous>, transform_indices = @transform_3, window_bounds = array<i64: 1, 32>}, {}, {pipeline_mode = #tpu.pipeline_mode<synchronous>, transform_indices = @transform_5, window_bounds = array<i64: 1, 32>}, {pipeline_mode = #tpu.pipeline_mode<synchronous>, transform_indices = @transform_6, window_bounds = array<i64: 1, 32>}, {transform_indices = @transform_7, window_bounds = array<i64: 32, 128>}, {transform_indices = @transform_8, window_bounds = array<i64: 1, 128>}, {transform_indices = @transform_9, window_bounds = array<i64: 1, 128>}, {transform_indices = @transform_10, window_bounds = array<i64: 8, 128>}]} {
    %c0_i32 = arith.constant 0 : i32
    %0 = arith.cmpi eq, %arg0, %c0_i32 : i32
    %1 = arith.extui %0 : i1 to i32
    %c0_i32_0 = arith.constant 0 : i32
    %2 = arith.cmpi ne, %1, %c0_i32_0 : i32
    scf.if %2 {
      "tpu.region"() ({
        %84 = tpu.sem_alloc : memref<!tpu.dma_semaphore, #tpu.memory_space<semaphore_mem>>
        tpu.enqueue_dma source(%arg1 : memref<8x32xf32, #tpu.memory_space<any>>) target(%arg12 : memref<8x32xf32, #tpu.memory_space<vmem>>) target_semaphore(%84 : memref<!tpu.dma_semaphore, #tpu.memory_space<semaphore_mem>>)
        tpu.wait_dma2 semaphore(%84 : memref<!tpu.dma_semaphore, #tpu.memory_space<semaphore_mem>>) src(%arg1 : memref<8x32xf32, #tpu.memory_space<any>>) dst(%arg12 : memref<8x32xf32, #tpu.memory_space<vmem>>)
        tpu.yield
      }) : () -> ()
      %c0_i32_15 = arith.constant 0 : i32
      "tpu.region"() ({
        %84 = tpu.sem_alloc : memref<!tpu.dma_semaphore, #tpu.memory_space<semaphore_mem>>
        %c0_i32_53 = arith.constant 0 : i32
        %c0_i32_54 = arith.constant 0 : i32
        %85 = tpu.memref_slice %arg14[%c0_i32_15, %c0_i32_53, %c0_i32_54] : memref<1x32x32xf32, #tpu.memory_space<vmem>> -> memref<1x32x32xf32, #tpu.memory_space<vmem>>
        %86 = tpu.memref_squeeze %85 : memref<1x32x32xf32, #tpu.memory_space<vmem>> -> memref<32x32xf32, #tpu.memory_space<vmem>>
        tpu.enqueue_dma source(%arg2 : memref<32x32xf32, #tpu.memory_space<any>>) target(%86 : memref<32x32xf32, #tpu.memory_space<vmem>>) target_semaphore(%84 : memref<!tpu.dma_semaphore, #tpu.memory_space<semaphore_mem>>)
        %c0_i32_55 = arith.constant 0 : i32
        %c0_i32_56 = arith.constant 0 : i32
        %87 = tpu.memref_slice %arg14[%c0_i32_15, %c0_i32_55, %c0_i32_56] : memref<1x32x32xf32, #tpu.memory_space<vmem>> -> memref<1x32x32xf32, #tpu.memory_space<vmem>>
        %88 = tpu.memref_squeeze %87 : memref<1x32x32xf32, #tpu.memory_space<vmem>> -> memref<32x32xf32, #tpu.memory_space<vmem>>
        tpu.wait_dma2 semaphore(%84 : memref<!tpu.dma_semaphore, #tpu.memory_space<semaphore_mem>>) src(%arg2 : memref<32x32xf32, #tpu.memory_space<any>>) dst(%88 : memref<32x32xf32, #tpu.memory_space<vmem>>)
        tpu.yield
      }) : () -> ()
      %c0_16 = arith.constant 0 : index
      %c0_17 = arith.constant 0 : index
      %28 = vector.load %arg12[%c0_16, %c0_17] : memref<8x32xf32, #tpu.memory_space<vmem>>, vector<8x32xf32>
      %c0_18 = arith.constant 0 : index
      %c0_19 = arith.constant 0 : index
      %c0_20 = arith.constant 0 : index
      %29 = vector.load %arg14[%c0_18, %c0_19, %c0_20] : memref<1x32x32xf32, #tpu.memory_space<vmem>>, vector<1x32x32xf32>
      %30 = vector.shape_cast %29 : vector<1x32x32xf32> to vector<32x32xf32>
      %cst_21 = arith.constant dense<0.000000e+00> : vector<8x32xf32>
      %31 = tpu.matmul %28, %30, %cst_21 {dimension_numbers = #tpu.dot_dimension_numbers<[1], [0], [0], [1], [0, 0, 1, 1], [], []>} : vector<8x32xf32>, vector<32x32xf32>, vector<8x32xf32> -> vector<8x32xf32>
      %c0_22 = arith.constant 0 : index
      %c0_23 = arith.constant 0 : index
      %32 = vector.load %arg3[%c0_22, %c0_23] : memref<1x32xf32, #tpu.memory_space<vmem>>, vector<1x32xf32>
      %c0_24 = arith.constant 0 : index
      %c0_25 = arith.constant 0 : index
      %33 = vector.load %arg4[%c0_24, %c0_25] : memref<1x32xf32, #tpu.memory_space<vmem>>, vector<1x32xf32>
      %cst_26 = arith.constant dense<0.000000e+00> : vector<32xf32>
      %34 = vector.multi_reduction <add>, %31, %cst_26 [0] : vector<8x32xf32> to vector<32xf32>
      %35 = vector.shape_cast %34 : vector<32xf32> to vector<1x32xf32>
      %cst_27 = arith.constant 1.250000e-01 : f32
      %36 = vector.broadcast %cst_27 : f32 to vector<1x32xf32>
      %37 = arith.mulf %35, %36 : vector<1x32xf32>
      %38 = vector.broadcast %37 : vector<1x32xf32> to vector<8x32xf32>
      %39 = arith.subf %31, %38 : vector<8x32xf32>
      %40 = arith.mulf %39, %39 : vector<8x32xf32>
      %cst_28 = arith.constant dense<0.000000e+00> : vector<32xf32>
      %41 = vector.multi_reduction <add>, %40, %cst_28 [0] : vector<8x32xf32> to vector<32xf32>
      %42 = vector.shape_cast %41 : vector<32xf32> to vector<1x32xf32>
      %cst_29 = arith.constant 1.250000e-01 : f32
      %43 = vector.broadcast %cst_29 : f32 to vector<1x32xf32>
      %44 = arith.mulf %42, %43 : vector<1x32xf32>
      %cst_30 = arith.constant 9.99999974E-6 : f32
      %45 = vector.broadcast %cst_30 : f32 to vector<1x32xf32>
      %46 = arith.addf %44, %45 : vector<1x32xf32>
      %47 = math.rsqrt %46 : vector<1x32xf32>
      %48 = arith.mulf %32, %47 : vector<1x32xf32>
      %49 = vector.broadcast %48 : vector<1x32xf32> to vector<8x32xf32>
      %50 = arith.mulf %39, %49 : vector<8x32xf32>
      %51 = vector.broadcast %33 : vector<1x32xf32> to vector<8x32xf32>
      %52 = arith.addf %50, %51 : vector<8x32xf32>
      %cst_31 = arith.constant 0.000000e+00 : f32
      %53 = vector.broadcast %cst_31 : f32 to vector<8x32xf32>
      %54 = arith.maximumf %52, %53 : vector<8x32xf32>
      %c0_32 = arith.constant 0 : index
      %c0_33 = arith.constant 0 : index
      %55 = vector.load %arg13[%c0_32, %c0_33] : memref<8x32xf32, #tpu.memory_space<vmem>>, vector<8x32xf32>
      tpu.vector_store %arg13[%c0_32, %c0_33], %54 {strides = array<i32>} : memref<8x32xf32, #tpu.memory_space<vmem>>, vector<8x32xf32>,
      %c0_i32_34 = arith.constant 0 : i32
      "tpu.region"() ({
        %84 = tpu.sem_alloc : memref<!tpu.dma_semaphore, #tpu.memory_space<semaphore_mem>>
        %c0_i32_53 = arith.constant 0 : i32
        %c0_i32_54 = arith.constant 0 : i32
        %85 = tpu.memref_slice %arg14[%c0_i32_34, %c0_i32_53, %c0_i32_54] : memref<1x32x32xf32, #tpu.memory_space<vmem>> -> memref<1x32x32xf32, #tpu.memory_space<vmem>>
        %86 = tpu.memref_squeeze %85 : memref<1x32x32xf32, #tpu.memory_space<vmem>> -> memref<32x32xf32, #tpu.memory_space<vmem>>
        tpu.enqueue_dma source(%arg5 : memref<32x32xf32, #tpu.memory_space<any>>) target(%86 : memref<32x32xf32, #tpu.memory_space<vmem>>) target_semaphore(%84 : memref<!tpu.dma_semaphore, #tpu.memory_space<semaphore_mem>>)
        %c0_i32_55 = arith.constant 0 : i32
        %c0_i32_56 = arith.constant 0 : i32
        %87 = tpu.memref_slice %arg14[%c0_i32_34, %c0_i32_55, %c0_i32_56] : memref<1x32x32xf32, #tpu.memory_space<vmem>> -> memref<1x32x32xf32, #tpu.memory_space<vmem>>
        %88 = tpu.memref_squeeze %87 : memref<1x32x32xf32, #tpu.memory_space<vmem>> -> memref<32x32xf32, #tpu.memory_space<vmem>>
        tpu.wait_dma2 semaphore(%84 : memref<!tpu.dma_semaphore, #tpu.memory_space<semaphore_mem>>) src(%arg5 : memref<32x32xf32, #tpu.memory_space<any>>) dst(%88 : memref<32x32xf32, #tpu.memory_space<vmem>>)
        tpu.yield
      }) : () -> ()
      %c0_35 = arith.constant 0 : index
      %c0_36 = arith.constant 0 : index
      %56 = vector.load %arg13[%c0_35, %c0_36] : memref<8x32xf32, #tpu.memory_space<vmem>>, vector<8x32xf32>
      %c0_37 = arith.constant 0 : index
      %c0_38 = arith.constant 0 : index
      %c0_39 = arith.constant 0 : index
      %57 = vector.load %arg14[%c0_37, %c0_38, %c0_39] : memref<1x32x32xf32, #tpu.memory_space<vmem>>, vector<1x32x32xf32>
      %58 = vector.shape_cast %57 : vector<1x32x32xf32> to vector<32x32xf32>
      %cst_40 = arith.constant dense<0.000000e+00> : vector<8x32xf32>
      %59 = tpu.matmul %56, %58, %cst_40 {dimension_numbers = #tpu.dot_dimension_numbers<[1], [0], [0], [1], [0, 0, 1, 1], [], []>} : vector<8x32xf32>, vector<32x32xf32>, vector<8x32xf32> -> vector<8x32xf32>
      %c0_41 = arith.constant 0 : index
      %c0_42 = arith.constant 0 : index
      %60 = vector.load %arg6[%c0_41, %c0_42] : memref<1x32xf32, #tpu.memory_space<vmem>>, vector<1x32xf32>
      %c0_43 = arith.constant 0 : index
      %c0_44 = arith.constant 0 : index
      %61 = vector.load %arg7[%c0_43, %c0_44] : memref<1x32xf32, #tpu.memory_space<vmem>>, vector<1x32xf32>
      %cst_45 = arith.constant dense<0.000000e+00> : vector<32xf32>
      %62 = vector.multi_reduction <add>, %59, %cst_45 [0] : vector<8x32xf32> to vector<32xf32>
      %63 = vector.shape_cast %62 : vector<32xf32> to vector<1x32xf32>
      %cst_46 = arith.constant 1.250000e-01 : f32
      %64 = vector.broadcast %cst_46 : f32 to vector<1x32xf32>
      %65 = arith.mulf %63, %64 : vector<1x32xf32>
      %66 = vector.broadcast %65 : vector<1x32xf32> to vector<8x32xf32>
      %67 = arith.subf %59, %66 : vector<8x32xf32>
      %68 = arith.mulf %67, %67 : vector<8x32xf32>
      %cst_47 = arith.constant dense<0.000000e+00> : vector<32xf32>
      %69 = vector.multi_reduction <add>, %68, %cst_47 [0] : vector<8x32xf32> to vector<32xf32>
      %70 = vector.shape_cast %69 : vector<32xf32> to vector<1x32xf32>
      %cst_48 = arith.constant 1.250000e-01 : f32
      %71 = vector.broadcast %cst_48 : f32 to vector<1x32xf32>
      %72 = arith.mulf %70, %71 : vector<1x32xf32>
      %cst_49 = arith.constant 9.99999974E-6 : f32
      %73 = vector.broadcast %cst_49 : f32 to vector<1x32xf32>
      %74 = arith.addf %72, %73 : vector<1x32xf32>
      %75 = math.rsqrt %74 : vector<1x32xf32>
      %76 = arith.mulf %60, %75 : vector<1x32xf32>
      %77 = vector.broadcast %76 : vector<1x32xf32> to vector<8x32xf32>
      %78 = arith.mulf %67, %77 : vector<8x32xf32>
      %79 = vector.broadcast %61 : vector<1x32xf32> to vector<8x32xf32>
      %80 = arith.addf %78, %79 : vector<8x32xf32>
      %cst_50 = arith.constant 0.000000e+00 : f32
      %81 = vector.broadcast %cst_50 : f32 to vector<8x32xf32>
      %82 = arith.maximumf %80, %81 : vector<8x32xf32>
      %c0_51 = arith.constant 0 : index
      %c0_52 = arith.constant 0 : index
      %83 = vector.load %arg12[%c0_51, %c0_52] : memref<8x32xf32, #tpu.memory_space<vmem>>, vector<8x32xf32>
      tpu.vector_store %arg12[%c0_51, %c0_52], %82 {strides = array<i32>} : memref<8x32xf32, #tpu.memory_space<vmem>>, vector<8x32xf32>,
    } else {
    }
    %c0 = arith.constant 0 : index
    %c0_1 = arith.constant 0 : index
    %3 = vector.load %arg12[%c0, %c0_1] : memref<8x32xf32, #tpu.memory_space<vmem>>, vector<8x32xf32>
    %c0_2 = arith.constant 0 : index
    %c0_3 = arith.constant 0 : index
    %4 = vector.load %arg8[%c0_2, %c0_3] : memref<32x128xf32, #tpu.memory_space<vmem>>, vector<32x128xf32>
    %cst = arith.constant dense<0.000000e+00> : vector<8x128xf32>
    %5 = tpu.matmul %3, %4, %cst {dimension_numbers = #tpu.dot_dimension_numbers<[1], [0], [0], [1], [0, 0, 1, 1], [], []>} : vector<8x32xf32>, vector<32x128xf32>, vector<8x128xf32> -> vector<8x128xf32>
    %c0_4 = arith.constant 0 : index
    %c0_5 = arith.constant 0 : index
    %6 = vector.load %arg9[%c0_4, %c0_5] : memref<1x128xf32, #tpu.memory_space<vmem>>, vector<1x128xf32>
    %c0_6 = arith.constant 0 : index
    %c0_7 = arith.constant 0 : index
    %7 = vector.load %arg10[%c0_6, %c0_7] : memref<1x128xf32, #tpu.memory_space<vmem>>, vector<1x128xf32>
    %cst_8 = arith.constant dense<0.000000e+00> : vector<128xf32>
    %8 = vector.multi_reduction <add>, %5, %cst_8 [0] : vector<8x128xf32> to vector<128xf32>
    %9 = vector.shape_cast %8 : vector<128xf32> to vector<1x128xf32>
    %cst_9 = arith.constant 1.250000e-01 : f32
    %10 = vector.broadcast %cst_9 : f32 to vector<1x128xf32>
    %11 = arith.mulf %9, %10 : vector<1x128xf32>
    %12 = vector.broadcast %11 : vector<1x128xf32> to vector<8x128xf32>
    %13 = arith.subf %5, %12 : vector<8x128xf32>
    %14 = arith.mulf %13, %13 : vector<8x128xf32>
    %cst_10 = arith.constant dense<0.000000e+00> : vector<128xf32>
    %15 = vector.multi_reduction <add>, %14, %cst_10 [0] : vector<8x128xf32> to vector<128xf32>
    %16 = vector.shape_cast %15 : vector<128xf32> to vector<1x128xf32>
    %cst_11 = arith.constant 1.250000e-01 : f32
    %17 = vector.broadcast %cst_11 : f32 to vector<1x128xf32>
    %18 = arith.mulf %16, %17 : vector<1x128xf32>
    %cst_12 = arith.constant 9.99999974E-6 : f32
    %19 = vector.broadcast %cst_12 : f32 to vector<1x128xf32>
    %20 = arith.addf %18, %19 : vector<1x128xf32>
    %21 = math.rsqrt %20 : vector<1x128xf32>
    %22 = arith.mulf %6, %21 : vector<1x128xf32>
    %23 = vector.broadcast %22 : vector<1x128xf32> to vector<8x128xf32>
    %24 = arith.mulf %13, %23 : vector<8x128xf32>
    %25 = vector.broadcast %7 : vector<1x128xf32> to vector<8x128xf32>
    %26 = arith.addf %24, %25 : vector<8x128xf32>
    %c0_13 = arith.constant 0 : index
    %c0_14 = arith.constant 0 : index
    %27 = vector.load %arg11[%c0_13, %c0_14] : memref<8x128xf32, #tpu.memory_space<vmem>>, vector<8x128xf32>
    tpu.vector_store %arg11[%c0_13, %c0_14], %26 {strides = array<i32>} : memref<8x128xf32, #tpu.memory_space<vmem>>, vector<8x128xf32>,
    return
  }
  func.func @transform_2(%arg0: i32) -> (i32, i32) {
    %c0_i32 = arith.constant 0 : i32
    %c0_i32_0 = arith.constant 0 : i32
    %c0_i32_1 = arith.constant 0 : i32
    return %c0_i32, %c0_i32_0 : i32, i32
  }
  func.func @transform_3(%arg0: i32) -> (i32, i32) {
    %c0_i32 = arith.constant 0 : i32
    %c0_i32_0 = arith.constant 0 : i32
    %c0_i32_1 = arith.constant 0 : i32
    return %c0_i32, %c0_i32_0 : i32, i32
  }
  func.func @transform_5(%arg0: i32) -> (i32, i32) {
    %c0_i32 = arith.constant 0 : i32
    %c0_i32_0 = arith.constant 0 : i32
    %c0_i32_1 = arith.constant 0 : i32
    return %c0_i32, %c0_i32_0 : i32, i32
  }
  func.func @transform_6(%arg0: i32) -> (i32, i32) {
    %c0_i32 = arith.constant 0 : i32
    %c0_i32_0 = arith.constant 0 : i32
    %c0_i32_1 = arith.constant 0 : i32
    return %c0_i32, %c0_i32_0 : i32, i32
  }
  func.func @transform_7(%arg0: i32) -> (i32, i32) {
    %c0_i32 = arith.constant 0 : i32
    %c0_i32_0 = arith.constant 0 : i32
    return %c0_i32, %arg0 : i32, i32
  }
  func.func @transform_8(%arg0: i32) -> (i32, i32) {
    %c0_i32 = arith.constant 0 : i32
    %c0_i32_0 = arith.constant 0 : i32
    return %c0_i32, %arg0 : i32, i32
  }
  func.func @transform_9(%arg0: i32) -> (i32, i32) {
    %c0_i32 = arith.constant 0 : i32
    %c0_i32_0 = arith.constant 0 : i32
    return %c0_i32, %arg0 : i32, i32
  }
  func.func @transform_10(%arg0: i32) -> (i32, i32) {
    %c0_i32 = arith.constant 0 : i32
    %c0_i32_0 = arith.constant 0 : i32
    return %c0_i32, %arg0 : i32, i32
  }
}

</mosaic_0001>

<llo_original>
// kernel: tpu_custom_call.1
$region0: #{tpu_custom_call.1}
  #allocation0 [shape = 'u32[]', space=smem, size = 0x4, offset = 0x4, fixed_abs, tag = 'smem constant byte address 0x4 - core index']
  #allocation1 [shape = 'u32[144,128]{1,0:T(1,128)}', space=vmem, size = 0x12000, scoped, tag = 'internal scratch']
  #allocation2 [shape = 'f32[8,32]{1,0:T(8,128)}', space=vmem, size = 0x1000, scoped, tag = 'scratch operand']
  #allocation3 [shape = 'f32[8,32]{1,0:T(8,128)}', space=vmem, size = 0x1000, scoped, tag = 'scratch operand']
  #allocation4 [shape = 'f32[1,32,32]{2,1,0:T(8,128)}', space=vmem, size = 0x4000, scoped, tag = 'scratch operand']
  #allocation5 [shape = 's32[2]{0}', space=sflag, size = 0x8, scoped, tag = 'scratch operand']
  #allocation11 [shape = 's32[]', space=sflag, size = 0x4, offset = 0, fixed_abs, tag = 'sflag constant byte address 0x0 - dummy sync flag']
  #allocation12 [shape = 's32[]', space=sflag, size = 0x4, offset = 0, fixed_abs, tag = 'sflag constant byte address 0x0 - dummy sync flag']
  #allocation13 [shape = 'u32[]', space=smem, size = 0x4, offset = 0x44, fixed_abs, tag = 'smem constant byte address 0x44 - assertion arg 0']
  #allocation14 [shape = 'u32[]', space=smem, size = 0x4, offset = 0x48, fixed_abs, tag = 'smem constant byte address 0x48 - assertion arg 1']
  #allocation16 [shape = 's32[]', space=sflag, size = 0x4, offset = 0, fixed_abs, tag = 'sflag constant byte address 0x0 - dummy sync flag']
  #allocation17 [shape = 's32[]', space=sflag, size = 0x4, offset = 0, fixed_abs, tag = 'sflag constant byte address 0x0 - dummy sync flag']
  #allocation19 [shape = 's32[]', space=sflag, size = 0x4, offset = 0, fixed_abs, tag = 'sflag constant byte address 0x0 - dummy sync flag']
  #allocation20 [shape = 's32[]', space=sflag, size = 0x4, offset = 0, fixed_abs, tag = 'sflag constant byte address 0x0 - dummy sync flag']
  %s0 = inlined_call_operand.hbm [shape: f32[8,32], index: 0, kind: input, shape index: {}]
  %s1 = inlined_call_operand.hbm [shape: f32[32,32], index: 1, kind: input, shape index: {}]
  %s2 = inlined_call_operand.vmem [shape: f32[1,32], index: 2, kind: input, shape index: {}]
  %s3 = inlined_call_operand.vmem [shape: f32[1,32], index: 3, kind: input, shape index: {}]
  %s4 = inlined_call_operand.hbm [shape: f32[32,32], index: 4, kind: input, shape index: {}]
  %s5 = inlined_call_operand.vmem [shape: f32[1,32], index: 5, kind: input, shape index: {}]
  %s6 = inlined_call_operand.vmem [shape: f32[1,32], index: 6, kind: input, shape index: {}]
  %s7 = inlined_call_operand.hbm [shape: f32[32,128], index: 7, kind: input, shape index: {}]
  %s8 = inlined_call_operand.vmem [shape: f32[1,128], index: 8, kind: input, shape index: {}]
  %s9 = inlined_call_operand.vmem [shape: f32[1,128], index: 9, kind: input, shape index: {}]
  %s10 = inlined_call_operand.hbm [shape: f32[8,128], index: 10, kind: output, shape index: {}]
  %s11 = sld [smem:[#allocation0]]
  $region61: #{tpu_custom_call.1} parent=0
    _
  %s13 = ssub.s32 1, %s11
  %s14 = scalar_select 0, %s13, %s11
  $region1: #{tpu_custom_call.1} parent=0
    #allocation6 [shape = 'u8[16384]{0}', space=vmem, size = 0x4000, scoped, tag = 'input window, operand 7, single buffered']
    #allocation7 [shape = 's32[1]{0}', space=sflag, size = 0x4, scoped, tag = 'scoped memory for tpu_custom_call.1']
    #allocation8 [shape = 's32[1]{0}', space=sflag, size = 0x4, scoped, tag = 'scoped memory for tpu_custom_call.1']
    #allocation9 [shape = 'u8[4096]{0}', space=vmem, size = 0x1000, scoped, tag = 'output window, operand 0, single buffered']
    %15 = vsyncpa [#allocation7], 0
    %16 = vsyncpa [#allocation8], 0
    // Predicated region
    $region2: #{tpu_custom_call.1} parent=1 // pred_check
      _
    $region3: #{tpu_custom_call.1} parent=1 // pred_check_branch
      %18 = sbr.rel (0) target = $region5
    $region4: #{tpu_custom_call.1} parent=1 // pred_region
      _
    $region5: #{tpu_custom_call.1} parent=1 // pred_fallthru
      _
    // Predicated region
    $region6: #{tpu_custom_call.1} parent=1 // pred_check
      _
    $region7: #{tpu_custom_call.1} parent=1 // pred_check_branch
      %20 = sbr.rel (0) target = $region9
    $region8: #{tpu_custom_call.1} parent=1 // pred_region
      _
    $region9: #{tpu_custom_call.1} parent=1 // pred_fallthru
      _
    // Predicated region
    $region10: #{tpu_custom_call.1} parent=1 // pred_check
      _
    $region11: #{tpu_custom_call.1} parent=1 // pred_check_branch
      %22 = sbr.rel (0) target = $region13
    $region12: #{tpu_custom_call.1} parent=1 // pred_region
      _
    $region13: #{tpu_custom_call.1} parent=1 // pred_fallthru
      _
    // Predicated region
    $region14: #{tpu_custom_call.1} parent=1 // pred_check
      _
    $region15: #{tpu_custom_call.1} parent=1 // pred_check_branch
      %24 = sbr.rel (0) target = $region17
    $region16: #{tpu_custom_call.1} parent=1 // pred_region
      _
    $region17: #{tpu_custom_call.1} parent=1 // pred_fallthru
      _
    // Predicated region
    $region18: #{tpu_custom_call.1} parent=1 // pred_check
      _
    $region19: #{tpu_custom_call.1} parent=1 // pred_check_branch
      %26 = sbr.rel (0) target = $region21
    $region20: #{tpu_custom_call.1} parent=1 // pred_region
      %s28 = ssub.s32 512, 512
      %29 = vsyncadd [#allocation7], %s28
      %s30 = sshll.u32 [#allocation6], 4
      %s31 = int_to_ptr.vmem [resolvable:$true] %s30
      %36 = dma.hbm_to_vmem [thread:$0]  %s7, 512, %s31, [#allocation7], 128, 128, 8
    $region21: #{tpu_custom_call.1} parent=1 // pred_fallthru
      _
    // Predicated region
    $region22: #{tpu_custom_call.1} parent=1 // pred_check
      _
    $region23: #{tpu_custom_call.1} parent=1 // pred_check_branch
      %38 = sbr.rel (0) target = $region25
    $region24: #{tpu_custom_call.1} parent=1 // pred_region
      _
    $region25: #{tpu_custom_call.1} parent=1 // pred_fallthru
      _
    // Predicated region
    $region26: #{tpu_custom_call.1} parent=1 // pred_check
      _
    $region27: #{tpu_custom_call.1} parent=1 // pred_check_branch
      %40 = sbr.rel (0) target = $region29
    $region28: #{tpu_custom_call.1} parent=1 // pred_region
      _
    $region29: #{tpu_custom_call.1} parent=1 // pred_fallthru
      _
    // Predicated region
    $region30: #{tpu_custom_call.1} parent=1 // pred_check
      _
    $region31: #{tpu_custom_call.1} parent=1 // pred_check_branch
      %42 = sbr.rel (0) target = $region33
    $region32: #{tpu_custom_call.1} parent=1 // pred_region
      %43 = dma.done [#allocation7], 512
    $region33: #{tpu_custom_call.1} parent=1 // pred_fallthru
      _
    %p44 = scmp.eq.s32.totalorder 0, 0
    // Predicated region
    $region34: #{tpu_custom_call.1} parent=1 // pred_check
      %p45 = pneg %p44
    $region35: #{tpu_custom_call.1} parent=1 // pred_check_branch
      %47 = sbr.rel (%p45) target = $region37
    $region36: #{tpu_custom_call.1} parent=1 // pred_region
      $region38: #{tpu_custom_call.1} parent=36
        #allocation10 [shape = 's32[1]{0}', space=sflag, size = 0x4, scoped, tag = 'scoped memory for tpu_custom_call.1']
        // Predicated region
        $region39: #{tpu_custom_call.1} parent=38 // pred_check
          _
        $region40: #{tpu_custom_call.1} parent=38 // pred_check_branch
          %49 = sbr.rel target = $region42
        $region41: #{tpu_custom_call.1} parent=38 // pred_region
          %50 = sst [smem:[#allocation13]] [#allocation12]
          %51 = sst [smem:[#allocation14]] [#allocation11]
        $region42: #{tpu_custom_call.1} parent=38 // pred_fallthru
          _
        %53 = shalt.err (0)
        %s55 = sshll.u32 [#allocation2], 4
        %s56 = int_to_ptr.vmem [resolvable:$true] %s55
        %58 = dma.hbm_to_vmem [thread:$0]  %s0, 128, %s56, [#allocation10]
        %s59 = smul.u32 8, 1
        %s60 = sshll.u32 %s59, 4
        %61 = dma.done [#allocation10], %s60
      $region43: #{tpu_custom_call.1} parent=36
        #allocation15 [shape = 's32[1]{0}', space=sflag, size = 0x4, scoped, tag = 'scoped memory for tpu_custom_call.1']
        // Predicated region
        $region44: #{tpu_custom_call.1} parent=43 // pred_check
          _
        $region45: #{tpu_custom_call.1} parent=43 // pred_check_branch
          %63 = sbr.rel target = $region47
        $region46: #{tpu_custom_call.1} parent=43 // pred_region
          %64 = sst [smem:[#allocation13]] [#allocation17]
          %65 = sst [smem:[#allocation14]] [#allocation16]
        $region47: #{tpu_custom_call.1} parent=43 // pred_fallthru
          _
        %67 = shalt.err (0)
        %s69 = sshll.u32 [#allocation4], 4
        %s70 = int_to_ptr.vmem [resolvable:$true] %s69
        %72 = dma.hbm_to_vmem [thread:$0]  %s1, 512, %s70, [#allocation15]
        %s73 = smul.u32 32, 1
        %s74 = sshll.u32 %s73, 4
        %75 = dma.done [#allocation15], %s74
      %v76 = vld [vmem:[#allocation2] sm:$0xff]
      %v77 = vld [vmem:[#allocation4] sm:$0xff]
      %v78 = vld [vmem:[#allocation4 + $0x8] sm:$0xff]
      %v79 = vld [vmem:[#allocation4 + $0x10] sm:$0xff]
      %v80 = vld [vmem:[#allocation4 + $0x18] sm:$0xff]
      %vm81 = vcmask 261120
      %v83 = vsel %vm81, %v76, 0
      %85 = vmatprep.subr.mxu0 0.0
      %86 = vmatpush1.msra.mxu0 %v77
      %87 = vmatprep.subr.mxu0 0.0
      %88 = vmatpush1.msra.mxu0 %v78
      %89 = vmatprep.subr.mxu0 0.0
      %90 = vmatpush1.msra.mxu0 %v79
      %91 = vmatprep.subr.mxu0 0.0
      %92 = vmatpush1.msra.mxu0 %v80
      %93 = vmatprep.subr.mxu0 0.0
      %94 = vmatpush1.msra.mxu0 0.0
      %95 = vmatprep.subr.mxu0 0.0
      %96 = vmatpush1.msra.mxu0 0.0
      %97 = vmatprep.subr.mxu0 0.0
      %98 = vmatpush1.msra.mxu0 0.0
      %99 = vmatprep.subr.mxu0 0.0
      %100 = vmatpush1.msra.mxu0 0.0
      %101 = vmatprep.subr.mxu0 0.0
      %102 = vmatpush1.msra.mxu0 0.0
      %103 = vmatprep.subr.mxu0 0.0
      %104 = vmatpush1.msra.mxu0 0.0
      %105 = vmatprep.subr.mxu0 0.0
      %106 = vmatpush1.msra.mxu0 0.0
      %107 = vmatprep.subr.mxu0 0.0
      %108 = vmatpush1.msra.mxu0 0.0
      %109 = vmatprep.subr.mxu0 0.0
      %110 = vmatpush1.msra.mxu0 0.0
      %111 = vmatprep.subr.mxu0 0.0
      %112 = vmatpush1.msra.mxu0 0.0
      %113 = vmatprep.subr.mxu0 0.0
      %114 = vmatpush1.msra.mxu0 0.0
      %115 = vmatprep.subr.mxu0 0.0
      %116 = vmatpush1.msra.mxu0 0.0
      %117 = vmatprep.subr.mxu0 0.0
      %118 = vmatpush1.msra.mxu0 0.0
      %119 = vmatprep.subr.mxu0 0.0
      %120 = vmatpush1.msra.mxu0 0.0
      %121 = vmatprep.subr.mxu0 0.0
      %122 = vmatpush1.msra.mxu0 0.0
      %123 = vmatprep.subr.mxu0 0.0
      %124 = vmatpush1.msra.mxu0 0.0
      %125 = vmatprep.subr.mxu0 0.0
      %126 = vmatpush1.msra.mxu0 0.0
      %127 = vmatprep.subr.mxu0 0.0
      %128 = vmatpush1.msra.mxu0 0.0
      %129 = vmatprep.subr.mxu0 0.0
      %130 = vmatpush1.msra.mxu0 0.0
      %131 = vmatprep.subr.mxu0 0.0
      %132 = vmatpush1.msra.mxu0 0.0
      %133 = vmatprep.subr.mxu0 0.0
      %134 = vmatpush1.msra.mxu0 0.0
      %135 = vmatprep.subr.mxu0 0.0
      %136 = vmatpush1.msra.mxu0 0.0
      %137 = vmatprep.subr.mxu0 0.0
      %138 = vmatpush1.msra.mxu0 0.0
      %139 = vmatprep.subr.mxu0 0.0
      %140 = vmatpush1.msra.mxu0 0.0
      %141 = vmatprep.subr.mxu0 0.0
      %142 = vmatpush1.msra.mxu0 0.0
      %143 = vmatprep.subr.mxu0 0.0
      %144 = vmatpush1.msra.mxu0 0.0
      %145 = vmatprep.subr.mxu0 0.0
      %146 = vmatpush1.msra.mxu0 0.0
      %147 = vmatprep.subr.mxu0 0.0
      %148 = vmatpush1.msra.mxu0 0.0
      %149 = vmatprep.mubr.f32.mxu0 0.0
      %150 = vmatmul.mubr.f32.gmra.mrb[0].mxu0 %v83
      %v151 = vpop.f32.mrb[0].mxu0
      %v152 = vadd.f32 0.0, %v151
      %v153 = vpop.f32.mrb[0].mxu0
      %154 = vdwg.mxu0
      %v155 = vld [vmem:[%s2] sm:$0x1]
      %v156 = vld [vmem:[%s3] sm:$0x1]
      %v157 = vsel %vm81, %v152, 0.0
      %v158 = vrot.slane %v157, 4
      %v159 = vadd.f32 %v157, %v158
      %v160 = vrot.slane %v159, 2
      %v161 = vadd.f32 %v159, %v160
      %v162 = vrot.slane %v161, 1
      %v163 = vadd.f32 %v161, %v162
      %v164 = vmul.f32 %v163, 0.125
      %v165 = vsub.f32 %v152, %v164
      %v166 = vmul.f32 %v165, %v165
      %v167 = vsel %vm81, %v166, 0.0
      %v168 = vrot.slane %v167, 4
      %v169 = vadd.f32 %v167, %v168
      %v170 = vrot.slane %v169, 2
      %v171 = vadd.f32 %v169, %v170
      %v172 = vrot.slane %v171, 1
      %v173 = vadd.f32 %v171, %v172
      %v174 = vmul.f32 %v173, 0.125
      %v175 = vadd.f32 %v174, 1e-05
      %v176 = vrsqrt.pop %v175
      %v177 = vmul.f32 %v155, %v176
      %v179 = vlaneseq
      %v180 = vshrl.u32 %v179, 7
      %v181 = vsub.s32 0, %v180
      %v182 = vrot.slane %v177, %v181
      %v184 = vmul.f32 %v165, %v182
      %v186 = vlaneseq
      %v187 = vshrl.u32 %v186, 7
      %v188 = vsub.s32 0, %v187
      %v189 = vrot.slane %v156, %v188
      %v191 = vadd.f32 %v184, %v189
      %v192 = vmax.f32 %v191, 0.0
      %193 = vst.msk [vmem:[#allocation3] sm:$0xff] %vm81, %v192
      $region48: #{tpu_custom_call.1} parent=36
        #allocation18 [shape = 's32[1]{0}', space=sflag, size = 0x4, scoped, tag = 'scoped memory for tpu_custom_call.1']
        // Predicated region
        $region49: #{tpu_custom_call.1} parent=48 // pred_check
          _
        $region50: #{tpu_custom_call.1} parent=48 // pred_check_branch
          %195 = sbr.rel target = $region52
        $region51: #{tpu_custom_call.1} parent=48 // pred_region
          %196 = sst [smem:[#allocation13]] [#allocation20]
          %197 = sst [smem:[#allocation14]] [#allocation19]
        $region52: #{tpu_custom_call.1} parent=48 // pred_fallthru
          _
        %199 = shalt.err (0)
        %s201 = sshll.u32 [#allocation4], 4
        %s202 = int_to_ptr.vmem [resolvable:$true] %s201
        %204 = dma.hbm_to_vmem [thread:$0]  %s4, 512, %s202, [#allocation18]
        %s205 = smul.u32 32, 1
        %s206 = sshll.u32 %s205, 4
        %207 = dma.done [#allocation18], %s206
      %v208 = vld [vmem:[#allocation3] sm:$0xff]
      %v209 = vld [vmem:[#allocation4] sm:$0xff]
      %v210 = vld [vmem:[#allocation4 + $0x8] sm:$0xff]
      %v211 = vld [vmem:[#allocation4 + $0x10] sm:$0xff]
      %v212 = vld [vmem:[#allocation4 + $0x18] sm:$0xff]
      %v214 = vsel %vm81, %v208, 0
      %216 = vmatprep.subr.mxu0 0.0
      %217 = vmatpush1.msra.mxu0 %v209
      %218 = vmatprep.subr.mxu0 0.0
      %219 = vmatpush1.msra.mxu0 %v210
      %220 = vmatprep.subr.mxu0 0.0
      %221 = vmatpush1.msra.mxu0 %v211
      %222 = vmatprep.subr.mxu0 0.0
      %223 = vmatpush1.msra.mxu0 %v212
      %224 = vmatprep.subr.mxu0 0.0
      %225 = vmatpush1.msra.mxu0 0.0
      %226 = vmatprep.subr.mxu0 0.0
      %227 = vmatpush1.msra.mxu0 0.0
      %228 = vmatprep.subr.mxu0 0.0
      %229 = vmatpush1.msra.mxu0 0.0
      %230 = vmatprep.subr.mxu0 0.0
      %231 = vmatpush1.msra.mxu0 0.0
      %232 = vmatprep.subr.mxu0 0.0
      %233 = vmatpush1.msra.mxu0 0.0
      %234 = vmatprep.subr.mxu0 0.0
      %235 = vmatpush1.msra.mxu0 0.0
      %236 = vmatprep.subr.mxu0 0.0
      %237 = vmatpush1.msra.mxu0 0.0
      %238 = vmatprep.subr.mxu0 0.0
      %239 = vmatpush1.msra.mxu0 0.0
      %240 = vmatprep.subr.mxu0 0.0
      %241 = vmatpush1.msra.mxu0 0.0
      %242 = vmatprep.subr.mxu0 0.0
      %243 = vmatpush1.msra.mxu0 0.0
      %244 = vmatprep.subr.mxu0 0.0
      %245 = vmatpush1.msra.mxu0 0.0
      %246 = vmatprep.subr.mxu0 0.0
      %247 = vmatpush1.msra.mxu0 0.0
      %248 = vmatprep.subr.mxu0 0.0
      %249 = vmatpush1.msra.mxu0 0.0
      %250 = vmatprep.subr.mxu0 0.0
      %251 = vmatpush1.msra.mxu0 0.0
      %252 = vmatprep.subr.mxu0 0.0
      %253 = vmatpush1.msra.mxu0 0.0
      %254 = vmatprep.subr.mxu0 0.0
      %255 = vmatpush1.msra.mxu0 0.0
      %256 = vmatprep.subr.mxu0 0.0
      %257 = vmatpush1.msra.mxu0 0.0
      %258 = vmatprep.subr.mxu0 0.0
      %259 = vmatpush1.msra.mxu0 0.0
      %260 = vmatprep.subr.mxu0 0.0
      %261 = vmatpush1.msra.mxu0 0.0
      %262 = vmatprep.subr.mxu0 0.0
      %263 = vmatpush1.msra.mxu0 0.0
      %264 = vmatprep.subr.mxu0 0.0
      %265 = vmatpush1.msra.mxu0 0.0
      %266 = vmatprep.subr.mxu0 0.0
      %267 = vmatpush1.msra.mxu0 0.0
      %268 = vmatprep.subr.mxu0 0.0
      %269 = vmatpush1.msra.mxu0 0.0
      %270 = vmatprep.subr.mxu0 0.0
      %271 = vmatpush1.msra.mxu0 0.0
      %272 = vmatprep.subr.mxu0 0.0
      %273 = vmatpush1.msra.mxu0 0.0
      %274 = vmatprep.subr.mxu0 0.0
      %275 = vmatpush1.msra.mxu0 0.0
      %276 = vmatprep.subr.mxu0 0.0
      %277 = vmatpush1.msra.mxu0 0.0
      %278 = vmatprep.subr.mxu0 0.0
      %279 = vmatpush1.msra.mxu0 0.0
      %280 = vmatprep.mubr.f32.mxu0 0.0
      %281 = vmatmul.mubr.f32.gmra.mrb[0].mxu0 %v214
      %v282 = vpop.f32.mrb[0].mxu0
      %v283 = vadd.f32 0.0, %v282
      %v284 = vpop.f32.mrb[0].mxu0
      %285 = vdwg.mxu0
      %v286 = vld [vmem:[%s5] sm:$0x1]
      %v287 = vld [vmem:[%s6] sm:$0x1]
      %v288 = vsel %vm81, %v283, 0.0
      %v289 = vrot.slane %v288, 4
      %v290 = vadd.f32 %v288, %v289
      %v291 = vrot.slane %v290, 2
      %v292 = vadd.f32 %v290, %v291
      %v293 = vrot.slane %v292, 1
      %v294 = vadd.f32 %v292, %v293
      %v295 = vmul.f32 %v294, 0.125
      %v296 = vsub.f32 %v283, %v295
      %v297 = vmul.f32 %v296, %v296
      %v298 = vsel %vm81, %v297, 0.0
      %v299 = vrot.slane %v298, 4
      %v300 = vadd.f32 %v298, %v299
      %v301 = vrot.slane %v300, 2
      %v302 = vadd.f32 %v300, %v301
      %v303 = vrot.slane %v302, 1
      %v304 = vadd.f32 %v302, %v303
      %v305 = vmul.f32 %v304, 0.125
      %v306 = vadd.f32 %v305, 1e-05
      %v307 = vrsqrt.pop %v306
      %v308 = vmul.f32 %v286, %v307
      %v310 = vlaneseq
      %v311 = vshrl.u32 %v310, 7
      %v312 = vsub.s32 0, %v311
      %v313 = vrot.slane %v308, %v312
      %v315 = vmul.f32 %v296, %v313
      %v317 = vlaneseq
      %v318 = vshrl.u32 %v317, 7
      %v319 = vsub.s32 0, %v318
      %v320 = vrot.slane %v287, %v319
      %v322 = vadd.f32 %v315, %v320
      %v323 = vmax.f32 %v322, 0.0
      %324 = vst.msk [vmem:[#allocation2] sm:$0xff] %vm81, %v323
    $region37: #{tpu_custom_call.1} parent=1 // pred_fallthru
      _
    %v325 = vld [vmem:[#allocation2] sm:$0xff]
    %v326 = vld [vmem:[#allocation6] sm:$0xff]
    %v327 = vld [vmem:[#allocation6 + $0x8] sm:$0xff]
    %v328 = vld [vmem:[#allocation6 + $0x10] sm:$0xff]
    %v329 = vld [vmem:[#allocation6 + $0x18] sm:$0xff]
    %vm330 = vcmask 261120
    %v332 = vsel %vm330, %v325, 0
    %334 = vmatprep.subr.mxu0 0.0
    %335 = vmatpush1.msra.mxu0 %v326
    %336 = vmatprep.subr.mxu0 0.0
    %337 = vmatpush1.msra.mxu0 %v327
    %338 = vmatprep.subr.mxu0 0.0
    %339 = vmatpush1.msra.mxu0 %v328
    %340 = vmatprep.subr.mxu0 0.0
    %341 = vmatpush1.msra.mxu0 %v329
    %342 = vmatprep.subr.mxu0 0.0
    %343 = vmatpush1.msra.mxu0 0.0
    %344 = vmatprep.subr.mxu0 0.0
    %345 = vmatpush1.msra.mxu0 0.0
    %346 = vmatprep.subr.mxu0 0.0
    %347 = vmatpush1.msra.mxu0 0.0
    %348 = vmatprep.subr.mxu0 0.0
    %349 = vmatpush1.msra.mxu0 0.0
    %350 = vmatprep.subr.mxu0 0.0
    %351 = vmatpush1.msra.mxu0 0.0
    %352 = vmatprep.subr.mxu0 0.0
    %353 = vmatpush1.msra.mxu0 0.0
    %354 = vmatprep.subr.mxu0 0.0
    %355 = vmatpush1.msra.mxu0 0.0
    %356 = vmatprep.subr.mxu0 0.0
    %357 = vmatpush1.msra.mxu0 0.0
    %358 = vmatprep.subr.mxu0 0.0
    %359 = vmatpush1.msra.mxu0 0.0
    %360 = vmatprep.subr.mxu0 0.0
    %361 = vmatpush1.msra.mxu0 0.0
    %362 = vmatprep.subr.mxu0 0.0
    %363 = vmatpush1.msra.mxu0 0.0
    %364 = vmatprep.subr.mxu0 0.0
    %365 = vmatpush1.msra.mxu0 0.0
    %366 = vmatprep.subr.mxu0 0.0
    %367 = vmatpush1.msra.mxu0 0.0
    %368 = vmatprep.subr.mxu0 0.0
    %369 = vmatpush1.msra.mxu0 0.0
    %370 = vmatprep.subr.mxu0 0.0
    %371 = vmatpush1.msra.mxu0 0.0
    %372 = vmatprep.subr.mxu0 0.0
    %373 = vmatpush1.msra.mxu0 0.0
    %374 = vmatprep.subr.mxu0 0.0
    %375 = vmatpush1.msra.mxu0 0.0
    %376 = vmatprep.subr.mxu0 0.0
    %377 = vmatpush1.msra.mxu0 0.0
    %378 = vmatprep.subr.mxu0 0.0
    %379 = vmatpush1.msra.mxu0 0.0
    %380 = vmatprep.subr.mxu0 0.0
    %381 = vmatpush1.msra.mxu0 0.0
    %382 = vmatprep.subr.mxu0 0.0
    %383 = vmatpush1.msra.mxu0 0.0
    %384 = vmatprep.subr.mxu0 0.0
    %385 = vmatpush1.msra.mxu0 0.0
    %386 = vmatprep.subr.mxu0 0.0
    %387 = vmatpush1.msra.mxu0 0.0
    %388 = vmatprep.subr.mxu0 0.0
    %389 = vmatpush1.msra.mxu0 0.0
    %390 = vmatprep.subr.mxu0 0.0
    %391 = vmatpush1.msra.mxu0 0.0
    %392 = vmatprep.subr.mxu0 0.0
    %393 = vmatpush1.msra.mxu0 0.0
    %394 = vmatprep.subr.mxu0 0.0
    %395 = vmatpush1.msra.mxu0 0.0
    %396 = vmatprep.subr.mxu0 0.0
    %397 = vmatpush1.msra.mxu0 0.0
    %398 = vmatprep.mubr.f32.mxu0 0.0
    %399 = vmatmul.mubr.f32.gmra.mrb[0].mxu0 %v332
    %v400 = vpop.f32.mrb[0].mxu0
    %v401 = vadd.f32 0.0, %v400
    %v402 = vpop.f32.mrb[0].mxu0
    %403 = vdwg.mxu0
    %v404 = vld [vmem:[%s8] sm:$0x1]
    %v405 = vld [vmem:[%s9] sm:$0x1]
    %v406 = vrot.slane %v401, 4
    %v407 = vadd.f32 %v401, %v406
    %v408 = vrot.slane %v407, 2
    %v409 = vadd.f32 %v407, %v408
    %v410 = vrot.slane %v409, 1
    %v411 = vadd.f32 %v409, %v410
    %v412 = vmul.f32 %v411, 0.125
    %v413 = vsub.f32 %v401, %v412
    %v414 = vmul.f32 %v413, %v413
    %v415 = vrot.slane %v414, 4
    %v416 = vadd.f32 %v414, %v415
    %v417 = vrot.slane %v416, 2
    %v418 = vadd.f32 %v416, %v417
    %v419 = vrot.slane %v418, 1
    %v420 = vadd.f32 %v418, %v419
    %v421 = vmul.f32 %v420, 0.125
    %v422 = vadd.f32 %v421, 1e-05
    %v423 = vrsqrt.pop %v422
    %v424 = vmul.f32 %v404, %v423
    %v426 = vlaneseq
    %v427 = vshrl.u32 %v426, 7
    %v428 = vsub.s32 0, %v427
    %v429 = vrot.slane %v424, %v428
    %v431 = vmul.f32 %v413, %v429
    %v433 = vlaneseq
    %v434 = vshrl.u32 %v433, 7
    %v435 = vsub.s32 0, %v434
    %v436 = vrot.slane %v405, %v435
    %v438 = vadd.f32 %v431, %v436
    %439 = vst [vmem:[#allocation9] sm:$0xff] %v438
    // Predicated region
    $region53: #{tpu_custom_call.1} parent=1 // pred_check
      _
    $region54: #{tpu_custom_call.1} parent=1 // pred_check_branch
      %441 = sbr.rel (0) target = $region56
    $region55: #{tpu_custom_call.1} parent=1 // pred_region
      %s443 = ssub.s32 128, 128
      %444 = vsyncadd [#allocation8], %s443
      %s446 = sshll.u32 [#allocation9], 4
      %s447 = int_to_ptr.vmem [resolvable:$true] %s446
      %449 = dma.vmem_to_hbm [thread:$0]  %s447, 128, %s10, [#allocation8]
    $region56: #{tpu_custom_call.1} parent=1 // pred_fallthru
      _
    // Predicated region
    $region57: #{tpu_custom_call.1} parent=1 // pred_check
      _
    $region58: #{tpu_custom_call.1} parent=1 // pred_check_branch
      %451 = sbr.rel (0) target = $region60
    $region59: #{tpu_custom_call.1} parent=1 // pred_region
      %452 = dma.done [#allocation8], 128
    $region60: #{tpu_custom_call.1} parent=1 // pred_fallthru
      _
    %453 = vsyncpa [#allocation7], 1
    %454 = vsyncpa [#allocation8], 1
  %455 = vsyncmov [#allocation5]
  %s456 = vpop.sfrf %455
  %p457 = scmp.eq.s32.totalorder %s456, 0
  %p458 = pneg %p457
  %460 = shalt.err (%p458)
  %s461 = scalar_lea.sflag [#allocation5], 1
  %462 = vsyncmov %s461
  %s463 = vpop.sfrf %462
  %p464 = scmp.eq.s32.totalorder %s463, 0
  %p465 = pneg %p464
  %467 = shalt.err (%p465)

</llo_original>
